<compile_context>
chip_gen: v7x
topology: tpu7x:2x2x1
jax: 0.10.0
libtpu: 0.0.40
codegen_flags: <defaults>
</compile_context>

<pallas_src>
import functools

import jax
import jax.numpy as jnp
from jax import lax
from jax.experimental import pallas as pl
from jax.experimental.pallas import tpu as pltpu


def _round_up(x, m):
    return m * ((x + m - 1) // m)


# --------------------------------------------------------------------------
# Kernel
# --------------------------------------------------------------------------
def policy_net_kernel(
    x_ref,        # (TILE_B, state_dim)  f32   raw state tile (cast in-kernel)
    w1_ref,       # (state_dim, 256)     bf16
    b1_ref,       # (1, 256)             f32
    w2_ref,       # (256, 128)           bf16
    b2_ref,       # (1, 128)             f32
    wh_ref,       # (128, HEAD_W)        bf16  fused [actor | critic | zero-pad]
    bh_ref,       # (1, HEAD_W)          f32
    out_ref,      # (TILE_B, HEAD_W)     bf16  lanes [0,A)=probs, lane A=value
    *,
    action_dim,
):
    # in-kernel cast: keeps HBM input traffic at the raw f32 state only
    x = x_ref[...].astype(jnp.bfloat16)

    # fc[0]: Linear(state_dim, 256) + ReLU   (bf16 operands, f32 accumulate)
    h1 = jnp.dot(x, w1_ref[...], preferred_element_type=jnp.float32) + b1_ref[...]
    h1 = jnp.maximum(h1, 0.0).astype(jnp.bfloat16)

    # fc[2]: Linear(256, 128) + ReLU
    h2 = jnp.dot(h1, w2_ref[...], preferred_element_type=jnp.float32) + b2_ref[...]
    h2 = jnp.maximum(h2, 0.0).astype(jnp.bfloat16)

    # fused heads: one lane-dense matmul; lane layout:
    #   [0, action_dim) -> actor logits, action_dim -> critic value, rest -> 0
    logits = jnp.dot(h2, wh_ref[...], preferred_element_type=jnp.float32) + bh_ref[...]

    col = lax.broadcasted_iota(jnp.int32, logits.shape, dimension=1)
    is_action = col < action_dim

    # softmax over the actor lanes only (padded lanes masked out)
    masked = jnp.where(is_action, logits, -jnp.inf)
    m = jnp.max(masked, axis=-1, keepdims=True)
    e = jnp.where(is_action, jnp.exp(logits - m), 0.0)
    denom = jnp.sum(e, axis=-1, keepdims=True)
    probs = e * pl.reciprocal(denom, approx=True)

    # single lane-dense bf16 store: probs | value | zeros
    out = jnp.where(is_action, probs, jnp.where(col == action_dim, logits, 0.0))
    out_ref[...] = out.astype(out_ref.dtype)


# --------------------------------------------------------------------------
# One-time parameter preparation (layout plumbing hoisted out of forward)
# --------------------------------------------------------------------------
def prepare_params(params):
    """Cast weights to bf16 and fuse actor+critic into one lane-dense head.

    Run once at init / parameter-update time, NOT per forward call.
    """
    action_dim = params["wa"].shape[1]
    head_w = _round_up(action_dim + 1, 128)

    wh = jnp.zeros((128, head_w), jnp.bfloat16)
    wh = wh.at[:, :action_dim].set(params["wa"].astype(jnp.bfloat16))
    wh = wh.at[:, action_dim:action_dim + 1].set(params["wc"].astype(jnp.bfloat16))
    bh = jnp.zeros((1, head_w), jnp.float32)
    bh = bh.at[:, :action_dim].set(params["ba"].reshape(1, -1).astype(jnp.float32))
    bh = bh.at[:, action_dim:action_dim + 1].set(
        params["bc"].reshape(1, -1).astype(jnp.float32))

    return {
        "w1": params["w1"].astype(jnp.bfloat16),
        "b1": params["b1"].reshape(1, -1).astype(jnp.float32),
        "w2": params["w2"].astype(jnp.bfloat16),
        "b2": params["b2"].reshape(1, -1).astype(jnp.float32),
        "wh": wh,
        "bh": bh,
        "action_dim": action_dim,
    }


def _choose_tile_b(batch, tile_b_max):
    """Batch tile: big enough to amortize step overhead, but keep >=2 grid
    steps when the batch allows it so v7x's two TensorCores both get work."""
    b_pad8 = _round_up(batch, 8)
    tile_b = min(tile_b_max, b_pad8)
    if b_pad8 > 8:
        tile_b = min(tile_b, _round_up(pl.cdiv(b_pad8, 2), 8))
    return max(tile_b, 8)


def _vmem_limit_bytes(tile_b, state_dim, head_w):
    """Tight-but-safe scoped-VMEM limit computed from the actual footprint."""
    x_bytes = 2 * tile_b * state_dim * 4            # double-buffered f32 input
    out_bytes = 2 * tile_b * head_w * 2             # double-buffered bf16 output
    w_bytes = 2 * (state_dim * 256 + 256 * 128 + 128 * head_w) * 2
    b_bytes = 2 * (256 + 128 + head_w) * 4
    live = tile_b * (2 * 256 + 128 + 2 * head_w) * 4   # f32 intermediates
    total = x_bytes + out_bytes + w_bytes + b_bytes + live
    return min(2 * total + (4 << 20), 32 << 20)     # headroom, well under 64 MiB


# --------------------------------------------------------------------------
# Forward wrapper
# --------------------------------------------------------------------------
def policy_network_forward(state, prepared, *, tile_b_max=512):
    """state: (B, state_dim) f32. prepared: output of prepare_params()."""
    B, state_dim = state.shape
    action_dim = prepared["action_dim"]
    head_w = prepared["wh"].shape[1]

    tile_b = _choose_tile_b(B, tile_b_max)
    b_pad = _round_up(B, tile_b)

    x = state.astype(jnp.float32)
    if b_pad != B:
        # pad batch rows only (no K padding, no dtype-cast pass); padded rows
        # produce bias-only garbage in the output and are sliced off below.
        x = jnp.pad(x, ((0, b_pad - B), (0, 0)))

    grid = (b_pad // tile_b,)

    out = pl.pallas_call(
        functools.partial(policy_net_kernel, action_dim=action_dim),
        out_shape=jax.ShapeDtypeStruct((b_pad, head_w), jnp.bfloat16),
        grid_spec=pltpu.PrefetchScalarGridSpec(
            num_scalar_prefetch=0,
            grid=grid,
            in_specs=[
                # activations: tiled over the batch axis (pipelined DMA);
                # last dim equals the full array dim -> (8,128) rule satisfied
                pl.BlockSpec((tile_b, state_dim), lambda i: (i, 0)),
                # weights / biases: constant index_map -> stay VMEM-resident
                pl.BlockSpec((state_dim, 256), lambda i: (0, 0)),
                pl.BlockSpec((1, 256), lambda i: (0, 0)),
                pl.BlockSpec((256, 128), lambda i: (0, 0)),
                pl.BlockSpec((1, 128), lambda i: (0, 0)),
                pl.BlockSpec((128, head_w), lambda i: (0, 0)),
                pl.BlockSpec((1, head_w), lambda i: (0, 0)),
            ],
            out_specs=pl.BlockSpec((tile_b, head_w), lambda i: (i, 0)),
        ),
        compiler_params=pltpu.CompilerParams(
            dimension_semantics=("parallel",),      # megacore sharding on v7x
            vmem_limit_bytes=_vmem_limit_bytes(tile_b, state_dim, head_w),
        ),
    )(x, prepared["w1"], prepared["b1"], prepared["w2"], prepared["b2"],
      prepared["wh"], prepared["bh"])

    probs = out[:B, :action_dim].astype(jnp.float32)
    value = out[:B, action_dim:action_dim + 1].astype(jnp.float32)
    return probs, value


# --------------------------------------------------------------------------
# Test scaffolding
# --------------------------------------------------------------------------
def init_params(key, state_dim, action_dim):
    """Deterministic synthetic parameters (shapes match nn.Linear layers)."""
    ks = jax.random.split(key, 8)
    scale = 0.05

    def w(k, shape):
        return (scale * jax.random.normal(k, shape)).astype(jnp.float32)

    return {
        "w1": w(ks[0], (state_dim, 256)),
        "b1": w(ks[1], (1, 256)),
        "w2": w(ks[2], (256, 128)),
        "b2": w(ks[3], (1, 128)),
        "wa": w(ks[4], (128, action_dim)),
        "ba": w(ks[5], (1, action_dim)),
        "wc": w(ks[6], (128, 1)),
        "bc": w(ks[7], (1, 1)),
    }


def reference_forward(state, params):
    """Pure-JAX f32 reference (original module semantics)."""
    h1 = jnp.maximum(state @ params["w1"] + params["b1"], 0.0)
    h2 = jnp.maximum(h1 @ params["w2"] + params["b2"], 0.0)
    logits = h2 @ params["wa"] + params["ba"]
    probs = jax.nn.softmax(logits, axis=-1)
    value = h2 @ params["wc"] + params["bc"]
    return probs, value


if __name__ == "__main__":
    key = jax.random.PRNGKey(0)
    k_state, k_state2, k_params = jax.random.split(key, 3)

    state_dim = 32
    action_dim = 8
    params = init_params(k_params, state_dim, action_dim)
    prepared = prepare_params(params)

    # bf16 matmul operands / bf16 output slab / approx reciprocal -> compare
    # against the f32 reference with a correspondingly loosened tolerance.
    for batch, k in ((8, k_state), (24, k_state2)):   # grid=1 and grid=2 paths
        state = jax.random.normal(k, (batch, state_dim), dtype=jnp.float32)

        probs, value = policy_network_forward(state, prepared)
        probs = jax.block_until_ready(probs)
        value = jax.block_until_ready(value)

        ref_probs, ref_value = reference_forward(state, params)

        assert probs.shape == (batch, action_dim)
        assert value.shape == (batch, 1)
        assert jnp.allclose(probs, ref_probs, atol=1e-2, rtol=1e-2)
        assert jnp.allclose(value, ref_value, atol=1e-2, rtol=1e-2)
        assert jnp.allclose(jnp.sum(probs, axis=-1), 1.0, atol=1e-2)

    print("KERNEL_OK")
</pallas_src>

<mosaic_0001>
module attributes {stable_mosaic.version = 11 : i64} {
  func.func @policy_net_kernel(%arg0: i32, %arg1: memref<8x32xf32, #tpu.memory_space<vmem>>, %arg2: memref<32x256xbf16, #tpu.memory_space<vmem>>, %arg3: memref<1x256xf32, #tpu.memory_space<vmem>>, %arg4: memref<256x128xbf16, #tpu.memory_space<vmem>>, %arg5: memref<1x128xf32, #tpu.memory_space<vmem>>, %arg6: memref<128x128xbf16, #tpu.memory_space<vmem>>, %arg7: memref<1x128xf32, #tpu.memory_space<vmem>>, %arg8: memref<8x128xbf16, #tpu.memory_space<vmem>>) attributes {dimension_semantics = [#tpu.dimension_semantics<parallel>], iteration_bounds = array<i64: 1>, scalar_prefetch = 0 : i64, scratch_operands = 0 : i64, tpu.core_type = #tpu.core_type<tc>, window_params = [{transform_indices = @transform_0, window_bounds = array<i64: 8, 32>}, {pipeline_mode = #tpu.pipeline_mode<synchronous>, transform_indices = @transform_1, window_bounds = array<i64: 32, 256>}, {pipeline_mode = #tpu.pipeline_mode<synchronous>, transform_indices = @transform_2, window_bounds = array<i64: 1, 256>}, {pipeline_mode = #tpu.pipeline_mode<synchronous>, transform_indices = @transform_3, window_bounds = array<i64: 256, 128>}, {pipeline_mode = #tpu.pipeline_mode<synchronous>, transform_indices = @transform_4, window_bounds = array<i64: 1, 128>}, {pipeline_mode = #tpu.pipeline_mode<synchronous>, transform_indices = @transform_5, window_bounds = array<i64: 128, 128>}, {pipeline_mode = #tpu.pipeline_mode<synchronous>, transform_indices = @transform_6, window_bounds = array<i64: 1, 128>}, {transform_indices = @transform_7, window_bounds = array<i64: 8, 128>}]} {
    %c0 = arith.constant 0 : index
    %c0_0 = arith.constant 0 : index
    %0 = vector.load %arg1[%c0, %c0_0] : memref<8x32xf32, #tpu.memory_space<vmem>>, vector<8x32xf32>
    %1 = arith.truncf %0 : vector<8x32xf32> to vector<8x32xbf16>
    %c0_1 = arith.constant 0 : index
    %c0_2 = arith.constant 0 : index
    %2 = vector.load %arg2[%c0_1, %c0_2] : memref<32x256xbf16, #tpu.memory_space<vmem>>, vector<32x256xbf16>
    %cst = arith.constant dense<0.000000e+00> : vector<8x256xf32>
    %3 = tpu.matmul %1, %2, %cst {dimension_numbers = #tpu.dot_dimension_numbers<[1], [0], [0], [1], [0, 0, 1, 1], [], []>} : vector<8x32xbf16>, vector<32x256xbf16>, vector<8x256xf32> -> vector<8x256xf32>
    %c0_3 = arith.constant 0 : index
    %c0_4 = arith.constant 0 : index
    %4 = vector.load %arg3[%c0_3, %c0_4] : memref<1x256xf32, #tpu.memory_space<vmem>>, vector<1x256xf32>
    %5 = vector.broadcast %4 : vector<1x256xf32> to vector<8x256xf32>
    %6 = arith.addf %3, %5 : vector<8x256xf32>
    %cst_5 = arith.constant 0.000000e+00 : f32
    %7 = vector.broadcast %cst_5 : f32 to vector<8x256xf32>
    %8 = arith.maximumf %6, %7 : vector<8x256xf32>
    %9 = arith.truncf %8 : vector<8x256xf32> to vector<8x256xbf16>
    %c0_6 = arith.constant 0 : index
    %c0_7 = arith.constant 0 : index
    %10 = vector.load %arg4[%c0_6, %c0_7] : memref<256x128xbf16, #tpu.memory_space<vmem>>, vector<256x128xbf16>
    %cst_8 = arith.constant dense<0.000000e+00> : vector<8x128xf32>
    %11 = tpu.matmul %9, %10, %cst_8 {dimension_numbers = #tpu.dot_dimension_numbers<[1], [0], [0], [1], [0, 0, 1, 1], [], []>} : vector<8x256xbf16>, vector<256x128xbf16>, vector<8x128xf32> -> vector<8x128xf32>
    %c0_9 = arith.constant 0 : index
    %c0_10 = arith.constant 0 : index
    %12 = vector.load %arg5[%c0_9, %c0_10] : memref<1x128xf32, #tpu.memory_space<vmem>>, vector<1x128xf32>
    %13 = vector.broadcast %12 : vector<1x128xf32> to vector<8x128xf32>
    %14 = arith.addf %11, %13 : vector<8x128xf32>
    %cst_11 = arith.constant 0.000000e+00 : f32
    %15 = vector.broadcast %cst_11 : f32 to vector<8x128xf32>
    %16 = arith.maximumf %14, %15 : vector<8x128xf32>
    %17 = arith.truncf %16 : vector<8x128xf32> to vector<8x128xbf16>
    %c0_12 = arith.constant 0 : index
    %c0_13 = arith.constant 0 : index
    %18 = vector.load %arg6[%c0_12, %c0_13] : memref<128x128xbf16, #tpu.memory_space<vmem>>, vector<128x128xbf16>
    %cst_14 = arith.constant dense<0.000000e+00> : vector<8x128xf32>
    %19 = tpu.matmul %17, %18, %cst_14 {dimension_numbers = #tpu.dot_dimension_numbers<[1], [0], [0], [1], [0, 0, 1, 1], [], []>} : vector<8x128xbf16>, vector<128x128xbf16>, vector<8x128xf32> -> vector<8x128xf32>
    %c0_15 = arith.constant 0 : index
    %c0_16 = arith.constant 0 : index
    %20 = vector.load %arg7[%c0_15, %c0_16] : memref<1x128xf32, #tpu.memory_space<vmem>>, vector<1x128xf32>
    %21 = vector.broadcast %20 : vector<1x128xf32> to vector<8x128xf32>
    %22 = arith.addf %19, %21 : vector<8x128xf32>
    %23 = tpu.iota {dimensions = array<i32: 1>} : vector<8x128xi32>
    %c8_i32 = arith.constant 8 : i32
    %24 = vector.broadcast %c8_i32 : i32 to vector<8x128xi32>
    %25 = arith.cmpi slt, %23, %24 : vector<8x128xi32>
    %cst_17 = arith.constant 0xFF800000 : f32
    %26 = vector.broadcast %cst_17 : f32 to vector<8x128xf32>
    %27 = arith.select %25, %22, %26 : vector<8x128xi1>, vector<8x128xf32>
    %cst_18 = arith.constant dense<0xFF800000> : vector<8xf32>
    %28 = vector.multi_reduction <maximumf>, %27, %cst_18 [1] : vector<8x128xf32> to vector<8xf32>
    %29 = vector.shape_cast %28 : vector<8xf32> to vector<8x1xf32>
    %30 = vector.broadcast %29 : vector<8x1xf32> to vector<8x128xf32>
    %31 = arith.subf %22, %30 : vector<8x128xf32>
    %32 = math.exp %31 : vector<8x128xf32>
    %cst_19 = arith.constant 0.000000e+00 : f32
    %33 = vector.broadcast %cst_19 : f32 to vector<8x128xf32>
    %34 = arith.select %25, %32, %33 : vector<8x128xi1>, vector<8x128xf32>
    %cst_20 = arith.constant dense<0.000000e+00> : vector<8xf32>
    %35 = vector.multi_reduction <add>, %34, %cst_20 [1] : vector<8x128xf32> to vector<8xf32>
    %36 = vector.shape_cast %35 : vector<8xf32> to vector<8x1xf32>
    %37 = tpu.reciprocal %36 {approx = true} : vector<8x1xf32> -> vector<8x1xf32>
    %38 = vector.broadcast %37 : vector<8x1xf32> to vector<8x128xf32>
    %39 = arith.mulf %34, %38 : vector<8x128xf32>
    %c8_i32_21 = arith.constant 8 : i32
    %40 = vector.broadcast %c8_i32_21 : i32 to vector<8x128xi32>
    %41 = arith.cmpi eq, %23, %40 : vector<8x128xi32>
    %cst_22 = arith.constant 0.000000e+00 : f32
    %42 = vector.broadcast %cst_22 : f32 to vector<8x128xf32>
    %43 = arith.select %41, %22, %42 : vector<8x128xi1>, vector<8x128xf32>
    %44 = arith.select %25, %39, %43 : vector<8x128xi1>, vector<8x128xf32>
    %45 = arith.truncf %44 : vector<8x128xf32> to vector<8x128xbf16>
    %c0_23 = arith.constant 0 : index
    %c0_24 = arith.constant 0 : index
    %46 = vector.load %arg8[%c0_23, %c0_24] : memref<8x128xbf16, #tpu.memory_space<vmem>>, vector<8x128xbf16>
    tpu.vector_store %arg8[%c0_23, %c0_24], %45 {strides = array<i32>} : memref<8x128xbf16, #tpu.memory_space<vmem>>, vector<8x128xbf16>,
    return
  }
  func.func @transform_0(%arg0: i32) -> (i32, i32) {
    %c0_i32 = arith.constant 0 : i32
    %c0_i32_0 = arith.constant 0 : i32
    return %arg0, %c0_i32 : i32, i32
  }
  func.func @transform_1(%arg0: i32) -> (i32, i32) {
    %c0_i32 = arith.constant 0 : i32
    %c0_i32_0 = arith.constant 0 : i32
    %c0_i32_1 = arith.constant 0 : i32
    return %c0_i32, %c0_i32_0 : i32, i32
  }
  func.func @transform_2(%arg0: i32) -> (i32, i32) {
    %c0_i32 = arith.constant 0 : i32
    %c0_i32_0 = arith.constant 0 : i32
    %c0_i32_1 = arith.constant 0 : i32
    return %c0_i32, %c0_i32_0 : i32, i32
  }
  func.func @transform_3(%arg0: i32) -> (i32, i32) {
    %c0_i32 = arith.constant 0 : i32
    %c0_i32_0 = arith.constant 0 : i32
    %c0_i32_1 = arith.constant 0 : i32
    return %c0_i32, %c0_i32_0 : i32, i32
  }
  func.func @transform_4(%arg0: i32) -> (i32, i32) {
    %c0_i32 = arith.constant 0 : i32
    %c0_i32_0 = arith.constant 0 : i32
    %c0_i32_1 = arith.constant 0 : i32
    return %c0_i32, %c0_i32_0 : i32, i32
  }
  func.func @transform_5(%arg0: i32) -> (i32, i32) {
    %c0_i32 = arith.constant 0 : i32
    %c0_i32_0 = arith.constant 0 : i32
    %c0_i32_1 = arith.constant 0 : i32
    return %c0_i32, %c0_i32_0 : i32, i32
  }
  func.func @transform_6(%arg0: i32) -> (i32, i32) {
    %c0_i32 = arith.constant 0 : i32
    %c0_i32_0 = arith.constant 0 : i32
    %c0_i32_1 = arith.constant 0 : i32
    return %c0_i32, %c0_i32_0 : i32, i32
  }
  func.func @transform_7(%arg0: i32) -> (i32, i32) {
    %c0_i32 = arith.constant 0 : i32
    %c0_i32_0 = arith.constant 0 : i32
    return %arg0, %c0_i32 : i32, i32
  }
}

</mosaic_0001>

<llo_original>
// kernel: tpu_custom_call.1
$region0: #{tpu_custom_call.1}
  #allocation0 [shape = 'u32[]', space=smem, size = 0x4, offset = 0x4, fixed_abs, tag = 'smem constant byte address 0x4 - core index']
  #allocation1 [shape = 'u32[144,128]{1,0:T(1,128)}', space=vmem, size = 0x12000, scoped, tag = 'internal scratch']
  %s0 = inlined_call_operand.hbm [shape: f32[8,32], index: 0, kind: input, shape index: {}]
  %s1 = inlined_call_operand.hbm [shape: bf16[32,256], index: 1, kind: input, shape index: {}]
  %s2 = inlined_call_operand.vmem [shape: f32[1,256], index: 2, kind: input, shape index: {}]
  %s3 = inlined_call_operand.hbm [shape: bf16[256,128], index: 3, kind: input, shape index: {}]
  %s4 = inlined_call_operand.vmem [shape: f32[1,128], index: 4, kind: input, shape index: {}]
  %s5 = inlined_call_operand.hbm [shape: bf16[128,128], index: 5, kind: input, shape index: {}]
  %s6 = inlined_call_operand.vmem [shape: f32[1,128], index: 6, kind: input, shape index: {}]
  %s7 = inlined_call_operand.hbm [shape: bf16[8,128], index: 7, kind: output, shape index: {}]
  %s8 = sld [smem:[#allocation0]]
  $region54: #{tpu_custom_call.1} parent=0
    _
  %s10 = ssub.s32 1, %s8
  %s11 = scalar_select 0, %s10, %s8
  $region1: #{tpu_custom_call.1} parent=0
    #allocation2 [shape = 'u8[4096]{0}', space=vmem, size = 0x1000, scoped, tag = 'input window, operand 0, single buffered']
    #allocation3 [shape = 's32[1]{0}', space=sflag, size = 0x4, scoped, tag = 'scoped memory for tpu_custom_call.1']
    #allocation4 [shape = 's32[1]{0}', space=sflag, size = 0x4, scoped, tag = 'scoped memory for tpu_custom_call.1']
    #allocation5 [shape = 'u8[16384]{0}', space=vmem, size = 0x4000, scoped, tag = 'input window, operand 1, single buffered']
    #allocation6 [shape = 's32[1]{0}', space=sflag, size = 0x4, scoped, tag = 'scoped memory for tpu_custom_call.1']
    #allocation7 [shape = 'u8[65536]{0}', space=vmem, size = 0x10000, scoped, tag = 'input window, operand 3, single buffered']
    #allocation8 [shape = 'u8[32768]{0}', space=vmem, size = 0x8000, scoped, tag = 'input window, operand 5, single buffered']
    #allocation9 [shape = 's32[1]{0}', space=sflag, size = 0x4, scoped, tag = 'scoped memory for tpu_custom_call.1']
    #allocation10 [shape = 'u8[2048]{0}', space=vmem, size = 0x800, scoped, tag = 'output window, operand 0, single buffered']
    %12 = vsyncpa [#allocation3], 0
    %13 = vsyncpa [#allocation6], 0
    %14 = vsyncpa [#allocation9], 0
    %15 = vsyncpa [#allocation4], 0
    // Predicated region
    $region2: #{tpu_custom_call.1} parent=1 // pred_check
      _
    $region3: #{tpu_custom_call.1} parent=1 // pred_check_branch
      %17 = sbr.rel (0) target = $region5
    $region4: #{tpu_custom_call.1} parent=1 // pred_region
      %s19 = ssub.s32 128, 128
      %20 = vsyncadd [#allocation3], %s19
      %s22 = sshll.u32 [#allocation2], 4
      %s23 = int_to_ptr.vmem [resolvable:$true] %s22
      %25 = dma.hbm_to_vmem [thread:$0]  %s0, 128, %s23, [#allocation3]
    $region5: #{tpu_custom_call.1} parent=1 // pred_fallthru
      _
    // Predicated region
    $region6: #{tpu_custom_call.1} parent=1 // pred_check
      _
    $region7: #{tpu_custom_call.1} parent=1 // pred_check_branch
      %27 = sbr.rel (0) target = $region9
    $region8: #{tpu_custom_call.1} parent=1 // pred_region
      %s29 = ssub.s32 512, 512
      %30 = vsyncadd [#allocation6], %s29
      %s31 = sshll.u32 [#allocation5], 4
      %s32 = int_to_ptr.vmem [resolvable:$true] %s31
      %37 = dma.hbm_to_vmem [thread:$0]  %s1, 512, %s32, [#allocation6], 128, 128, 8
    $region9: #{tpu_custom_call.1} parent=1 // pred_fallthru
      _
    // Predicated region
    $region10: #{tpu_custom_call.1} parent=1 // pred_check
      _
    $region11: #{tpu_custom_call.1} parent=1 // pred_check_branch
      %39 = sbr.rel (0) target = $region13
    $region12: #{tpu_custom_call.1} parent=1 // pred_region
      _
    $region13: #{tpu_custom_call.1} parent=1 // pred_fallthru
      _
    // Predicated region
    $region14: #{tpu_custom_call.1} parent=1 // pred_check
      _
    $region15: #{tpu_custom_call.1} parent=1 // pred_check_branch
      %41 = sbr.rel (0) target = $region17
    $region16: #{tpu_custom_call.1} parent=1 // pred_region
      %s43 = ssub.s32 2048, 2048
      %44 = vsyncadd [#allocation6], %s43
      %s45 = sshll.u32 [#allocation7], 4
      %s46 = int_to_ptr.vmem [resolvable:$true] %s45
      %51 = dma.hbm_to_vmem [thread:$0]  %s3, 2048, %s46, [#allocation6], 64, 64, 4
    $region17: #{tpu_custom_call.1} parent=1 // pred_fallthru
      _
    // Predicated region
    $region18: #{tpu_custom_call.1} parent=1 // pred_check
      _
    $region19: #{tpu_custom_call.1} parent=1 // pred_check_branch
      %53 = sbr.rel (0) target = $region21
    $region20: #{tpu_custom_call.1} parent=1 // pred_region
      _
    $region21: #{tpu_custom_call.1} parent=1 // pred_fallthru
      _
    // Predicated region
    $region22: #{tpu_custom_call.1} parent=1 // pred_check
      _
    $region23: #{tpu_custom_call.1} parent=1 // pred_check_branch
      %55 = sbr.rel (0) target = $region25
    $region24: #{tpu_custom_call.1} parent=1 // pred_region
      %s57 = ssub.s32 1024, 1024
      %58 = vsyncadd [#allocation9], %s57
      %s59 = sshll.u32 [#allocation8], 4
      %s60 = int_to_ptr.vmem [resolvable:$true] %s59
      %65 = dma.hbm_to_vmem [thread:$0]  %s5, 1024, %s60, [#allocation9], 64, 64, 4
    $region25: #{tpu_custom_call.1} parent=1 // pred_fallthru
      _
    // Predicated region
    $region26: #{tpu_custom_call.1} parent=1 // pred_check
      _
    $region27: #{tpu_custom_call.1} parent=1 // pred_check_branch
      %67 = sbr.rel (0) target = $region29
    $region28: #{tpu_custom_call.1} parent=1 // pred_region
      _
    $region29: #{tpu_custom_call.1} parent=1 // pred_fallthru
      _
    // Predicated region
    $region30: #{tpu_custom_call.1} parent=1 // pred_check
      _
    $region31: #{tpu_custom_call.1} parent=1 // pred_check_branch
      %69 = sbr.rel (0) target = $region33
    $region32: #{tpu_custom_call.1} parent=1 // pred_region
      %70 = dma.done [#allocation3], 128
    $region33: #{tpu_custom_call.1} parent=1 // pred_fallthru
      _
    // Predicated region
    $region34: #{tpu_custom_call.1} parent=1 // pred_check
      _
    $region35: #{tpu_custom_call.1} parent=1 // pred_check_branch
      %72 = sbr.rel (0) target = $region37
    $region36: #{tpu_custom_call.1} parent=1 // pred_region
      %73 = dma.done [#allocation6], 512
    $region37: #{tpu_custom_call.1} parent=1 // pred_fallthru
      _
    // Predicated region
    $region38: #{tpu_custom_call.1} parent=1 // pred_check
      _
    $region39: #{tpu_custom_call.1} parent=1 // pred_check_branch
      %75 = sbr.rel (0) target = $region41
    $region40: #{tpu_custom_call.1} parent=1 // pred_region
      %76 = dma.done [#allocation6], 2048
    $region41: #{tpu_custom_call.1} parent=1 // pred_fallthru
      _
    // Predicated region
    $region42: #{tpu_custom_call.1} parent=1 // pred_check
      _
    $region43: #{tpu_custom_call.1} parent=1 // pred_check_branch
      %78 = sbr.rel (0) target = $region45
    $region44: #{tpu_custom_call.1} parent=1 // pred_region
      %79 = dma.done [#allocation9], 1024
    $region45: #{tpu_custom_call.1} parent=1 // pred_fallthru
      _
    %v81 = vld [vmem:[#allocation2] sm:$0xff]
    %v82 = vpack.c.bf16 %v81, %v81
    %v83 = vld [vmem:[#allocation5] sm:$0xff]
    %v84 = vld [vmem:[#allocation5 + $0x8] sm:$0xff]
    %v85 = vld [vmem:[#allocation5 + $0x10] sm:$0xff]
    %v86 = vld [vmem:[#allocation5 + $0x18] sm:$0xff]
    %v87 = vld [vmem:[%s2] sm:$0x3]
    %v89 = vlaneseq
    %v90 = vshrl.u32 %v89, 7
    %v91 = vsub.s32 0, %v90
    %v92 = vrot.slane %v87, %v91
    %v93 = vlaneseq
    %v94 = vshrl.u32 %v93, 7
    %v95 = vsub.s32 1, %v94
    %v96 = vrot.slane %v87, %v95
    %v103 = vunpack.c.l.b16 %v83
    %v104 = vunpack.c.h.b16 %v83
    %v105 = vunpack.c.l.b16 %v84
    %v106 = vunpack.c.h.b16 %v84
    %v107 = vunpack.c.l.b16 %v85
    %v108 = vunpack.c.h.b16 %v85
    %v109 = vunpack.c.l.b16 %v86
    %v110 = vunpack.c.h.b16 %v86
    %v111 = vpack.c.b16 %v105, %v103
    %v112 = vpack.c.b16 %v106, %v104
    %v113 = vpack.c.b16 %v109, %v107
    %v114 = vpack.c.b16 %v110, %v108
    %vm119 = vcmask 261120
    %v121 = vsel %vm119, %v82, 0
    %123 = vmatprep.subr.bf16.mxu0 %v112
    %124 = vmatpush1.bf16.msra.mxu0 %v111
    %125 = vmatprep.subr.bf16.mxu0 %v114
    %126 = vmatpush1.bf16.msra.mxu0 %v113
    %127 = vmatprep.subr.bf16.mxu0 0
    %128 = vmatpush1.bf16.msra.mxu0 0
    %129 = vmatprep.subr.bf16.mxu0 0
    %130 = vmatpush1.bf16.msra.mxu0 0
    %131 = vmatprep.subr.bf16.mxu0 0
    %132 = vmatpush1.bf16.msra.mxu0 0
    %133 = vmatprep.subr.bf16.mxu0 0
    %134 = vmatpush1.bf16.msra.mxu0 0
    %135 = vmatprep.subr.bf16.mxu0 0
    %136 = vmatpush1.bf16.msra.mxu0 0
    %137 = vmatprep.subr.bf16.mxu0 0
    %138 = vmatpush1.bf16.msra.mxu0 0
    %139 = vmatprep.subr.bf16.mxu0 0
    %140 = vmatpush1.bf16.msra.mxu0 0
    %141 = vmatprep.subr.bf16.mxu0 0
    %142 = vmatpush1.bf16.msra.mxu0 0
    %143 = vmatprep.subr.bf16.mxu0 0
    %144 = vmatpush1.bf16.msra.mxu0 0
    %145 = vmatprep.subr.bf16.mxu0 0
    %146 = vmatpush1.bf16.msra.mxu0 0
    %147 = vmatprep.subr.bf16.mxu0 0
    %148 = vmatpush1.bf16.msra.mxu0 0
    %149 = vmatprep.subr.bf16.mxu0 0
    %150 = vmatpush1.bf16.msra.mxu0 0
    %151 = vmatprep.subr.bf16.mxu0 0
    %152 = vmatpush1.bf16.msra.mxu0 0
    %153 = vmatprep.subr.bf16.mxu0 0
    %154 = vmatpush1.bf16.msra.mxu0 0
    %155 = vmatprep.mubr.bf16.mxu0 0
    %156 = vmatmul.mubr.bf16.gmra.mrb[0].mxu0 %v121
    %v157 = vpop.f32.mrb[0].mxu0
    %v158 = vadd.f32 %v92, %v157
    %v159 = vpop.f32.mrb[0].mxu0
    %v160 = vadd.f32 %v96, %v159
    %v161 = vpop.f32.mrb[0].mxu0
    %v162 = vpop.f32.mrb[0].mxu0
    %163 = vdwg.mxu0
    %v164 = vmax.f32 %v158, 0.0
    %v165 = vmax.f32 %v160, 0.0
    %v166 = vpack.c.bf16 %v164, %v164
    %v167 = vpack.c.bf16 %v165, %v165
    %v168 = vld [vmem:[#allocation7] sm:$0xf]
    %v169 = vld [vmem:[#allocation7 + $0x4] sm:$0xf]
    %v170 = vld [vmem:[#allocation7 + $0x8] sm:$0xf]
    %v171 = vld [vmem:[#allocation7 + $0xc] sm:$0xf]
    %v172 = vld [vmem:[#allocation7 + $0x10] sm:$0xf]
    %v173 = vld [vmem:[#allocation7 + $0x14] sm:$0xf]
    %v174 = vld [vmem:[#allocation7 + $0x18] sm:$0xf]
    %v175 = vld [vmem:[#allocation7 + $0x1c] sm:$0xf]
    %v176 = vld [vmem:[#allocation7 + $0x20] sm:$0xf]
    %v177 = vld [vmem:[#allocation7 + $0x24] sm:$0xf]
    %v178 = vld [vmem:[#allocation7 + $0x28] sm:$0xf]
    %v179 = vld [vmem:[#allocation7 + $0x2c] sm:$0xf]
    %v180 = vld [vmem:[#allocation7 + $0x30] sm:$0xf]
    %v181 = vld [vmem:[#allocation7 + $0x34] sm:$0xf]
    %v182 = vld [vmem:[#allocation7 + $0x38] sm:$0xf]
    %v183 = vld [vmem:[#allocation7 + $0x3c] sm:$0xf]
    %v184 = vld [vmem:[#allocation7 + $0x40] sm:$0xf]
    %v185 = vld [vmem:[#allocation7 + $0x44] sm:$0xf]
    %v186 = vld [vmem:[#allocation7 + $0x48] sm:$0xf]
    %v187 = vld [vmem:[#allocation7 + $0x4c] sm:$0xf]
    %v188 = vld [vmem:[#allocation7 + $0x50] sm:$0xf]
    %v189 = vld [vmem:[#allocation7 + $0x54] sm:$0xf]
    %v190 = vld [vmem:[#allocation7 + $0x58] sm:$0xf]
    %v191 = vld [vmem:[#allocation7 + $0x5c] sm:$0xf]
    %v192 = vld [vmem:[#allocation7 + $0x60] sm:$0xf]
    %v193 = vld [vmem:[#allocation7 + $0x64] sm:$0xf]
    %v194 = vld [vmem:[#allocation7 + $0x68] sm:$0xf]
    %v195 = vld [vmem:[#allocation7 + $0x6c] sm:$0xf]
    %v196 = vld [vmem:[#allocation7 + $0x70] sm:$0xf]
    %v197 = vld [vmem:[#allocation7 + $0x74] sm:$0xf]
    %v198 = vld [vmem:[#allocation7 + $0x78] sm:$0xf]
    %v199 = vld [vmem:[#allocation7 + $0x7c] sm:$0xf]
    %v200 = vld [vmem:[%s4] sm:$0x1]
    %v202 = vlaneseq
    %v203 = vshrl.u32 %v202, 7
    %v204 = vsub.s32 0, %v203
    %v205 = vrot.slane %v200, %v204
    %v239 = vunpack.c.l.b16 %v168
    %v240 = vunpack.c.l.b16 %v169
    %v241 = vunpack.c.l.b16 %v170
    %v242 = vunpack.c.l.b16 %v171
    %v243 = vunpack.c.l.b16 %v172
    %v244 = vunpack.c.l.b16 %v173
    %v245 = vunpack.c.l.b16 %v174
    %v246 = vunpack.c.l.b16 %v175
    %v247 = vunpack.c.l.b16 %v176
    %v248 = vunpack.c.l.b16 %v177
    %v249 = vunpack.c.l.b16 %v178
    %v250 = vunpack.c.l.b16 %v179
    %v251 = vunpack.c.l.b16 %v180
    %v252 = vunpack.c.l.b16 %v181
    %v253 = vunpack.c.l.b16 %v182
    %v254 = vunpack.c.l.b16 %v183
    %v255 = vunpack.c.l.b16 %v184
    %v256 = vunpack.c.l.b16 %v185
    %v257 = vunpack.c.l.b16 %v186
    %v258 = vunpack.c.l.b16 %v187
    %v259 = vunpack.c.l.b16 %v188
    %v260 = vunpack.c.l.b16 %v189
    %v261 = vunpack.c.l.b16 %v190
    %v262 = vunpack.c.l.b16 %v191
    %v263 = vunpack.c.l.b16 %v192
    %v264 = vunpack.c.l.b16 %v193
    %v265 = vunpack.c.l.b16 %v194
    %v266 = vunpack.c.l.b16 %v195
    %v267 = vunpack.c.l.b16 %v196
    %v268 = vunpack.c.l.b16 %v197
    %v269 = vunpack.c.l.b16 %v198
    %v270 = vunpack.c.l.b16 %v199
    %v271 = vpack.c.b16 %v240, %v239
    %v272 = vpack.c.b16 %v242, %v241
    %v273 = vpack.c.b16 %v244, %v243
    %v274 = vpack.c.b16 %v246, %v245
    %v275 = vpack.c.b16 %v248, %v247
    %v276 = vpack.c.b16 %v250, %v249
    %v277 = vpack.c.b16 %v252, %v251
    %v278 = vpack.c.b16 %v254, %v253
    %v279 = vpack.c.b16 %v256, %v255
    %v280 = vpack.c.b16 %v258, %v257
    %v281 = vpack.c.b16 %v260, %v259
    %v282 = vpack.c.b16 %v262, %v261
    %v283 = vpack.c.b16 %v264, %v263
    %v284 = vpack.c.b16 %v266, %v265
    %v285 = vpack.c.b16 %v268, %v267
    %v286 = vpack.c.b16 %v270, %v269
    %303 = vmatprep.subr.bf16.mxu0 0
    %304 = vmatpush1.bf16.msra.mxu0 %v271
    %305 = vmatprep.subr.bf16.mxu0 0
    %306 = vmatpush1.bf16.msra.mxu0 %v272
    %307 = vmatprep.subr.bf16.mxu0 0
    %308 = vmatpush1.bf16.msra.mxu0 %v273
    %309 = vmatprep.subr.bf16.mxu0 0
    %310 = vmatpush1.bf16.msra.mxu0 %v274
    %311 = vmatprep.subr.bf16.mxu0 0
    %312 = vmatpush1.bf16.msra.mxu0 %v275
    %313 = vmatprep.subr.bf16.mxu0 0
    %314 = vmatpush1.bf16.msra.mxu0 %v276
    %315 = vmatprep.subr.bf16.mxu0 0
    %316 = vmatpush1.bf16.msra.mxu0 %v277
    %317 = vmatprep.subr.bf16.mxu0 0
    %318 = vmatpush1.bf16.msra.mxu0 %v278
    %319 = vmatprep.subr.bf16.mxu0 0
    %320 = vmatpush1.bf16.msra.mxu0 %v279
    %321 = vmatprep.subr.bf16.mxu0 0
    %322 = vmatpush1.bf16.msra.mxu0 %v280
    %323 = vmatprep.subr.bf16.mxu0 0
    %324 = vmatpush1.bf16.msra.mxu0 %v281
    %325 = vmatprep.subr.bf16.mxu0 0
    %326 = vmatpush1.bf16.msra.mxu0 %v282
    %327 = vmatprep.subr.bf16.mxu0 0
    %328 = vmatpush1.bf16.msra.mxu0 %v283
    %329 = vmatprep.subr.bf16.mxu0 0
    %330 = vmatpush1.bf16.msra.mxu0 %v284
    %331 = vmatprep.subr.bf16.mxu0 0
    %332 = vmatpush1.bf16.msra.mxu0 %v285
    %333 = vmatprep.subr.bf16.mxu0 0
    %334 = vmatpush1.bf16.msra.mxu0 %v286
    %335 = vmatprep.mubr.bf16.mxu0 %v167
    %336 = vmatmul.mubr.bf16.gmra.mrb[0].mxu0 %v166
    %v337 = vpop.f32.mrb[0].mxu0
    %v338 = vadd.f32 %v205, %v337
    %v339 = vpop.f32.mrb[0].mxu0
    %v340 = vpop.f32.mrb[0].mxu0
    %v341 = vpop.f32.mrb[0].mxu0
    %342 = vdwg.mxu0
    %v343 = vmax.f32 %v338, 0.0
    %v344 = vpack.c.bf16 %v343, %v343
    %v345 = vld [vmem:[#allocation8] sm:$0xf]
    %v346 = vld [vmem:[#allocation8 + $0x4] sm:$0xf]
    %v347 = vld [vmem:[#allocation8 + $0x8] sm:$0xf]
    %v348 = vld [vmem:[#allocation8 + $0xc] sm:$0xf]
    %v349 = vld [vmem:[#allocation8 + $0x10] sm:$0xf]
    %v350 = vld [vmem:[#allocation8 + $0x14] sm:$0xf]
    %v351 = vld [vmem:[#allocation8 + $0x18] sm:$0xf]
    %v352 = vld [vmem:[#allocation8 + $0x1c] sm:$0xf]
    %v353 = vld [vmem:[#allocation8 + $0x20] sm:$0xf]
    %v354 = vld [vmem:[#allocation8 + $0x24] sm:$0xf]
    %v355 = vld [vmem:[#allocation8 + $0x28] sm:$0xf]
    %v356 = vld [vmem:[#allocation8 + $0x2c] sm:$0xf]
    %v357 = vld [vmem:[#allocation8 + $0x30] sm:$0xf]
    %v358 = vld [vmem:[#allocation8 + $0x34] sm:$0xf]
    %v359 = vld [vmem:[#allocation8 + $0x38] sm:$0xf]
    %v360 = vld [vmem:[#allocation8 + $0x3c] sm:$0xf]
    %v361 = vld [vmem:[%s6] sm:$0x1]
    %v363 = vlaneseq
    %v364 = vshrl.u32 %v363, 7
    %v365 = vsub.s32 0, %v364
    %v366 = vrot.slane %v361, %v365
    %v384 = vunpack.c.l.b16 %v345
    %v385 = vunpack.c.l.b16 %v346
    %v386 = vunpack.c.l.b16 %v347
    %v387 = vunpack.c.l.b16 %v348
    %v388 = vunpack.c.l.b16 %v349
    %v389 = vunpack.c.l.b16 %v350
    %v390 = vunpack.c.l.b16 %v351
    %v391 = vunpack.c.l.b16 %v352
    %v392 = vunpack.c.l.b16 %v353
    %v393 = vunpack.c.l.b16 %v354
    %v394 = vunpack.c.l.b16 %v355
    %v395 = vunpack.c.l.b16 %v356
    %v396 = vunpack.c.l.b16 %v357
    %v397 = vunpack.c.l.b16 %v358
    %v398 = vunpack.c.l.b16 %v359
    %v399 = vunpack.c.l.b16 %v360
    %v400 = vpack.c.b16 %v385, %v384
    %v401 = vpack.c.b16 %v387, %v386
    %v402 = vpack.c.b16 %v389, %v388
    %v403 = vpack.c.b16 %v391, %v390
    %v404 = vpack.c.b16 %v393, %v392
    %v405 = vpack.c.b16 %v395, %v394
    %v406 = vpack.c.b16 %v397, %v396
    %v407 = vpack.c.b16 %v399, %v398
    %416 = vmatprep.subr.bf16.mxu0 0
    %417 = vmatpush1.bf16.msra.mxu0 %v400
    %418 = vmatprep.subr.bf16.mxu0 0
    %419 = vmatpush1.bf16.msra.mxu0 %v401
    %420 = vmatprep.subr.bf16.mxu0 0
    %421 = vmatpush1.bf16.msra.mxu0 %v402
    %422 = vmatprep.subr.bf16.mxu0 0
    %423 = vmatpush1.bf16.msra.mxu0 %v403
    %424 = vmatprep.subr.bf16.mxu0 0
    %425 = vmatpush1.bf16.msra.mxu0 %v404
    %426 = vmatprep.subr.bf16.mxu0 0
    %427 = vmatpush1.bf16.msra.mxu0 %v405
    %428 = vmatprep.subr.bf16.mxu0 0
    %429 = vmatpush1.bf16.msra.mxu0 %v406
    %430 = vmatprep.subr.bf16.mxu0 0
    %431 = vmatpush1.bf16.msra.mxu0 %v407
    %432 = vmatprep.subr.bf16.mxu0 0
    %433 = vmatpush1.bf16.msra.mxu0 0
    %434 = vmatprep.subr.bf16.mxu0 0
    %435 = vmatpush1.bf16.msra.mxu0 0
    %436 = vmatprep.subr.bf16.mxu0 0
    %437 = vmatpush1.bf16.msra.mxu0 0
    %438 = vmatprep.subr.bf16.mxu0 0
    %439 = vmatpush1.bf16.msra.mxu0 0
    %440 = vmatprep.subr.bf16.mxu0 0
    %441 = vmatpush1.bf16.msra.mxu0 0
    %442 = vmatprep.subr.bf16.mxu0 0
    %443 = vmatpush1.bf16.msra.mxu0 0
    %444 = vmatprep.subr.bf16.mxu0 0
    %445 = vmatpush1.bf16.msra.mxu0 0
    %446 = vmatprep.subr.bf16.mxu0 0
    %447 = vmatpush1.bf16.msra.mxu0 0
    %448 = vmatprep.mubr.bf16.mxu0 0
    %449 = vmatmul.mubr.bf16.gmra.mrb[0].mxu0 %v344
    %v450 = vpop.f32.mrb[0].mxu0
    %v451 = vadd.f32 %v366, %v450
    %v452 = vpop.f32.mrb[0].mxu0
    %v453 = vpop.f32.mrb[0].mxu0
    %v454 = vpop.f32.mrb[0].mxu0
    %455 = vdwg.mxu0
    %v456 = vlaneseq
    %v457 = vand.u32 %v456, 127
    %vm458 = vcmp.lt.s32.totalorder %v457, 8
    %v459 = vsel %vm458, %v451, -inf
    %460 = vmax.xlane.f32.xlu0 %v459
    %v461 = vpop.xlane.xlu0 %460
    %v462 = vsub.f32 %v451, %v461
    %v463 = vmul.f32 %v462, 1.442695
    %v464 = vpow.pop %v463
    %v465 = vsel %vm458, %v464, 0.0
    %466 = vadd.xlane.f32.xlu0 %v465
    %v467 = vpop.xlane.xlu0 %466
    %v468 = vrcp.pop %v467
    %v469 = vmul.f32 %v465, %v468
    %vm470 = vcmp.eq.s32.totalorder %v457, 8
    %v471 = vsel %vm470, %v451, 0.0
    %v472 = vsel %vm458, %v469, %v471
    %v473 = vpack.c.bf16 %v472, %v472
    %474 = vst [vmem:[#allocation10] sm:$0xf] %v473
    // Predicated region
    $region46: #{tpu_custom_call.1} parent=1 // pred_check
      _
    $region47: #{tpu_custom_call.1} parent=1 // pred_check_branch
      %476 = sbr.rel (0) target = $region49
    $region48: #{tpu_custom_call.1} parent=1 // pred_region
      %s478 = ssub.s32 64, 64
      %479 = vsyncadd [#allocation4], %s478
      %s481 = sshll.u32 [#allocation10], 4
      %s482 = int_to_ptr.vmem [resolvable:$true] %s481
      %484 = dma.vmem_to_hbm [thread:$0]  %s482, 64, %s7, [#allocation4]
    $region49: #{tpu_custom_call.1} parent=1 // pred_fallthru
      _
    // Predicated region
    $region50: #{tpu_custom_call.1} parent=1 // pred_check
      _
    $region51: #{tpu_custom_call.1} parent=1 // pred_check_branch
      %486 = sbr.rel (0) target = $region53
    $region52: #{tpu_custom_call.1} parent=1 // pred_region
      %487 = dma.done [#allocation4], 64
    $region53: #{tpu_custom_call.1} parent=1 // pred_fallthru
      _
    %488 = vsyncpa [#allocation3], 1
    %489 = vsyncpa [#allocation6], 1
    %490 = vsyncpa [#allocation9], 1
    %491 = vsyncpa [#allocation4], 1

</llo_original>
